<compile_context>
chip_gen: v5e
topology: v5e:2x2
jax: 0.10.0
libtpu: 0.0.40
codegen_flags: <defaults>
</compile_context>

<pallas_src>
import jax
import jax.numpy as jnp
from jax import lax
from jax.experimental import pallas as pl
from jax.experimental.pallas import tpu as pltpu


def rnn_fc_logsoftmax_kernel(tok_ref, emb_ref, h0_ref, whh_ref, wfc_ref, bfc_ref,
                             out_ref, hn_ref):
    """Embedding gather + full recurrence + final linear + log_softmax.

    tok_ref: (T*Bp, 1) int32  time-major padded tokens (row t*Bp+b = tokens[b, t])
    emb_ref: (Vp, H)          pre-projected embedding: E @ W_ih^T + b_ih + b_hh,
                              zero-padded to Vp = 128 rows
    h0_ref : (Bp, H)          initial hidden state (padded rows are zero)
    whh_ref: (H, H)           hidden->hidden weight, already transposed (W_hh^T)
    wfc_ref: (H, O_pad)       fc weight, transposed and lane-padded with zeros
    bfc_ref: (1, O_pad)       fc bias, padded lanes set to -1e30
    out_ref: (Bp, O_pad)      log-softmax over dim=1 (padded lanes ~ -1e30)
    hn_ref : (Bp, H)          final hidden state
    """
    TBp, _ = tok_ref.shape
    Vp, H = emb_ref.shape
    Bp = h0_ref.shape[0]
    T = TBp // Bp

    # --- In-kernel embedding gather (one-hot matmul on the MXU, lane-dense) ---
    lane = lax.broadcasted_iota(jnp.int32, (TBp, Vp), 1)
    onehot = (lane == tok_ref[...]).astype(jnp.float32)          # (TBp, Vp)
    x_all = jnp.dot(onehot, emb_ref[...],
                    preferred_element_type=jnp.float32)          # (TBp, H)

    # --- Recurrence: only h @ W_hh^T + tanh on the serial critical path ------
    whh = whh_ref[...]          # loaded once, stays in vregs across the unroll
    h = h0_ref[...]
    for t in range(T):          # T is static (=8): fully unrolled
        x_t = x_all[t * Bp:(t + 1) * Bp, :]        # one sublane-tile slice
        # NOTE: a VPU broadcast-MAC formulation of this (2..8)x32x32 matmul is a
        # candidate to measure against the MXU path (serial latency bound).
        h = jnp.tanh(x_t + jnp.dot(h, whh, preferred_element_type=jnp.float32))
    hn_ref[...] = h

    # --- FC + log-softmax on a lane-dense (Bp, 128) tile ---------------------
    logits = (jnp.dot(h, wfc_ref[...], preferred_element_type=jnp.float32)
              + bfc_ref[...])                                    # (Bp, O_pad)
    m = jnp.max(logits, axis=1, keepdims=True)
    z = logits - m
    lse = jnp.log(jnp.sum(jnp.exp(z), axis=1, keepdims=True))
    out_ref[...] = z - lse


def prepare_kernel_params(params, lane=128):
    """One-time parameter preprocessing (NOT paid per forward call)."""
    V, H = params["embedding"].shape
    O = params["w_fc"].shape[0]
    o_pad = ((O + lane - 1) // lane) * lane
    v_pad = ((V + lane - 1) // lane) * lane   # one-hot contraction runs over lanes

    # Fold W_ih and both RNN biases into the embedding table:
    #   gather(E) @ W_ih^T + b  ==  gather(E @ W_ih^T + b)   (row-wise exact)
    emb_proj = (params["embedding"] @ params["w_ih"].T
                + params["b_ih"] + params["b_hh"])               # (V, H)
    emb_pad = jnp.zeros((v_pad, H), jnp.float32).at[:V].set(emb_proj)

    wfc_t = jnp.zeros((H, o_pad), jnp.float32).at[:, :O].set(params["w_fc"].T)
    bfc = jnp.full((1, o_pad), -1e30, jnp.float32).at[0, :O].set(params["b_fc"])

    kparams = {
        "emb_proj_pad": emb_pad,        # (Vp, H)
        "w_hh_t": params["w_hh"].T,     # (H, H)
        "w_fc_t": wfc_t,                # (H, O_pad)
        "b_fc_pad": bfc,                # (1, O_pad)
    }
    return kparams, O


def simple_rnn_forward(tokens, hidden, kparams, out_size):
    """tokens: (B, T) int32; hidden: (num_layers=1, B, H) float32."""
    B, T = tokens.shape
    H = kparams["w_hh_t"].shape[0]
    o_pad = kparams["w_fc_t"].shape[1]
    Bp = 8  # pad batch to one full sublane tile -> unmasked vreg traffic

    # Time-major padded token column: row t*Bp + b holds tokens[b, t].
    tok_pad = jnp.zeros((T, Bp), jnp.int32).at[:, :B].set(tokens.T)
    tok_col = tok_pad.reshape(T * Bp, 1)

    h0 = jnp.zeros((Bp, H), jnp.float32).at[:B].set(hidden[0])

    vmem = pl.BlockSpec(memory_space=pltpu.MemorySpace.VMEM)

    out_pad, hn_pad = pl.pallas_call(
        rnn_fc_logsoftmax_kernel,
        out_shape=(jax.ShapeDtypeStruct((Bp, o_pad), jnp.float32),
                   jax.ShapeDtypeStruct((Bp, H), jnp.float32)),
        in_specs=[vmem] * 6,
        out_specs=(vmem, vmem),
        # h0 (input index 2) aliases hn (output index 1): no extra writeback buf.
        input_output_aliases={2: 1},
    )(tok_col, kparams["emb_proj_pad"], h0, kparams["w_hh_t"],
      kparams["w_fc_t"], kparams["b_fc_pad"])

    return out_pad[:B, :out_size], hn_pad[:B][None]      # ((B, O), (1, B, H))


def init_params(key, input_size, hidden_size, output_size):
    ks = jax.random.split(key, 7)
    s = 1.0 / jnp.sqrt(hidden_size)
    return {
        "embedding": jax.random.normal(ks[0], (input_size, hidden_size), jnp.float32),
        "w_ih": jax.random.uniform(ks[1], (hidden_size, hidden_size), jnp.float32, -s, s),
        "w_hh": jax.random.uniform(ks[2], (hidden_size, hidden_size), jnp.float32, -s, s),
        "b_ih": jax.random.uniform(ks[3], (hidden_size,), jnp.float32, -s, s),
        "b_hh": jax.random.uniform(ks[4], (hidden_size,), jnp.float32, -s, s),
        "w_fc": jax.random.uniform(ks[5], (output_size, hidden_size), jnp.float32, -s, s),
        "b_fc": jax.random.uniform(ks[6], (output_size,), jnp.float32, -s, s),
    }


def reference_forward(tokens, hidden, params):
    x = jnp.take(params["embedding"], tokens, axis=0)   # (B, T, H)
    h = hidden[0]
    T = x.shape[1]
    for t in range(T):
        h = jnp.tanh(x[:, t, :] @ params["w_ih"].T + params["b_ih"]
                     + h @ params["w_hh"].T + params["b_hh"])
    logits = h @ params["w_fc"].T + params["b_fc"]
    logp = logits - jax.scipy.special.logsumexp(logits, axis=1, keepdims=True)
    return logp, h[None]


if __name__ == "__main__":
    input_size, hidden_size, output_size = 16, 32, 10   # vocab, hidden, classes
    batch, seq = 2, 8

    key = jax.random.PRNGKey(0)
    pkey, tkey = jax.random.split(key)
    params = init_params(pkey, input_size, hidden_size, output_size)
    kparams, out_size = prepare_kernel_params(params)

    tokens = jax.random.randint(tkey, (batch, seq), 0, input_size, jnp.int32)
    hidden0 = jnp.zeros((1, batch, hidden_size), jnp.float32)   # initHidden (num_layers=1)

    out, hn = simple_rnn_forward(tokens, hidden0, kparams, out_size)
    out, hn = jax.block_until_ready((out, hn))

    ref_out, ref_hn = reference_forward(tokens, hidden0, params)
    assert jnp.allclose(out, ref_out, atol=1e-5, rtol=1e-5), \
        float(jnp.max(jnp.abs(out - ref_out)))
    assert jnp.allclose(hn, ref_hn, atol=1e-5, rtol=1e-5), \
        float(jnp.max(jnp.abs(hn - ref_hn)))

    print("KERNEL_OK")
</pallas_src>

<mosaic_0001>
module attributes {stable_mosaic.version = 11 : i64} {
  func.func @rnn_fc_logsoftmax_kernel(%arg0: memref<64x1xi32, #tpu.memory_space<vmem>>, %arg1: memref<128x32xf32, #tpu.memory_space<vmem>>, %arg2: memref<8x32xf32, #tpu.memory_space<vmem>>, %arg3: memref<32x32xf32, #tpu.memory_space<vmem>>, %arg4: memref<32x128xf32, #tpu.memory_space<vmem>>, %arg5: memref<1x128xf32, #tpu.memory_space<vmem>>, %arg6: memref<8x128xf32, #tpu.memory_space<vmem>>, %arg7: memref<8x32xf32, #tpu.memory_space<vmem>>) attributes {dimension_semantics = [], scalar_prefetch = 0 : i64, scratch_operands = 0 : i64, tpu.core_type = #tpu.core_type<tc>} {
    %0 = tpu.iota {dimensions = array<i32: 1>} : vector<64x128xi32>
    %c0 = arith.constant 0 : index
    %c0_0 = arith.constant 0 : index
    %1 = vector.load %arg0[%c0, %c0_0] : memref<64x1xi32, #tpu.memory_space<vmem>>, vector<64x1xi32>
    %2 = vector.broadcast %1 : vector<64x1xi32> to vector<64x128xi32>
    %3 = arith.cmpi eq, %0, %2 : vector<64x128xi32>
    %4 = arith.extui %3 : vector<64x128xi1> to vector<64x128xi32>
    %5 = arith.sitofp %4 : vector<64x128xi32> to vector<64x128xf32>
    %c0_1 = arith.constant 0 : index
    %c0_2 = arith.constant 0 : index
    %6 = vector.load %arg1[%c0_1, %c0_2] : memref<128x32xf32, #tpu.memory_space<vmem>>, vector<128x32xf32>
    %cst = arith.constant dense<0.000000e+00> : vector<64x32xf32>
    %7 = tpu.matmul %5, %6, %cst {dimension_numbers = #tpu.dot_dimension_numbers<[1], [0], [0], [1], [0, 0, 1, 1], [], []>} : vector<64x128xf32>, vector<128x32xf32>, vector<64x32xf32> -> vector<64x32xf32>
    %c0_3 = arith.constant 0 : index
    %c0_4 = arith.constant 0 : index
    %8 = vector.load %arg3[%c0_3, %c0_4] : memref<32x32xf32, #tpu.memory_space<vmem>>, vector<32x32xf32>
    %c0_5 = arith.constant 0 : index
    %c0_6 = arith.constant 0 : index
    %9 = vector.load %arg2[%c0_5, %c0_6] : memref<8x32xf32, #tpu.memory_space<vmem>>, vector<8x32xf32>
    %10 = vector.extract_strided_slice %7 {offsets = [0, 0], sizes = [8, 32], strides = [1, 1]} : vector<64x32xf32> to vector<8x32xf32>
    %cst_7 = arith.constant dense<0.000000e+00> : vector<8x32xf32>
    %11 = tpu.matmul %9, %8, %cst_7 {dimension_numbers = #tpu.dot_dimension_numbers<[1], [0], [0], [1], [0, 0, 1, 1], [], []>} : vector<8x32xf32>, vector<32x32xf32>, vector<8x32xf32> -> vector<8x32xf32>
    %12 = arith.addf %10, %11 : vector<8x32xf32>
    %13 = math.tanh %12 : vector<8x32xf32>
    %14 = vector.extract_strided_slice %7 {offsets = [8, 0], sizes = [8, 32], strides = [1, 1]} : vector<64x32xf32> to vector<8x32xf32>
    %cst_8 = arith.constant dense<0.000000e+00> : vector<8x32xf32>
    %15 = tpu.matmul %13, %8, %cst_8 {dimension_numbers = #tpu.dot_dimension_numbers<[1], [0], [0], [1], [0, 0, 1, 1], [], []>} : vector<8x32xf32>, vector<32x32xf32>, vector<8x32xf32> -> vector<8x32xf32>
    %16 = arith.addf %14, %15 : vector<8x32xf32>
    %17 = math.tanh %16 : vector<8x32xf32>
    %18 = vector.extract_strided_slice %7 {offsets = [16, 0], sizes = [8, 32], strides = [1, 1]} : vector<64x32xf32> to vector<8x32xf32>
    %cst_9 = arith.constant dense<0.000000e+00> : vector<8x32xf32>
    %19 = tpu.matmul %17, %8, %cst_9 {dimension_numbers = #tpu.dot_dimension_numbers<[1], [0], [0], [1], [0, 0, 1, 1], [], []>} : vector<8x32xf32>, vector<32x32xf32>, vector<8x32xf32> -> vector<8x32xf32>
    %20 = arith.addf %18, %19 : vector<8x32xf32>
    %21 = math.tanh %20 : vector<8x32xf32>
    %22 = vector.extract_strided_slice %7 {offsets = [24, 0], sizes = [8, 32], strides = [1, 1]} : vector<64x32xf32> to vector<8x32xf32>
    %cst_10 = arith.constant dense<0.000000e+00> : vector<8x32xf32>
    %23 = tpu.matmul %21, %8, %cst_10 {dimension_numbers = #tpu.dot_dimension_numbers<[1], [0], [0], [1], [0, 0, 1, 1], [], []>} : vector<8x32xf32>, vector<32x32xf32>, vector<8x32xf32> -> vector<8x32xf32>
    %24 = arith.addf %22, %23 : vector<8x32xf32>
    %25 = math.tanh %24 : vector<8x32xf32>
    %26 = vector.extract_strided_slice %7 {offsets = [32, 0], sizes = [8, 32], strides = [1, 1]} : vector<64x32xf32> to vector<8x32xf32>
    %cst_11 = arith.constant dense<0.000000e+00> : vector<8x32xf32>
    %27 = tpu.matmul %25, %8, %cst_11 {dimension_numbers = #tpu.dot_dimension_numbers<[1], [0], [0], [1], [0, 0, 1, 1], [], []>} : vector<8x32xf32>, vector<32x32xf32>, vector<8x32xf32> -> vector<8x32xf32>
    %28 = arith.addf %26, %27 : vector<8x32xf32>
    %29 = math.tanh %28 : vector<8x32xf32>
    %30 = vector.extract_strided_slice %7 {offsets = [40, 0], sizes = [8, 32], strides = [1, 1]} : vector<64x32xf32> to vector<8x32xf32>
    %cst_12 = arith.constant dense<0.000000e+00> : vector<8x32xf32>
    %31 = tpu.matmul %29, %8, %cst_12 {dimension_numbers = #tpu.dot_dimension_numbers<[1], [0], [0], [1], [0, 0, 1, 1], [], []>} : vector<8x32xf32>, vector<32x32xf32>, vector<8x32xf32> -> vector<8x32xf32>
    %32 = arith.addf %30, %31 : vector<8x32xf32>
    %33 = math.tanh %32 : vector<8x32xf32>
    %34 = vector.extract_strided_slice %7 {offsets = [48, 0], sizes = [8, 32], strides = [1, 1]} : vector<64x32xf32> to vector<8x32xf32>
    %cst_13 = arith.constant dense<0.000000e+00> : vector<8x32xf32>
    %35 = tpu.matmul %33, %8, %cst_13 {dimension_numbers = #tpu.dot_dimension_numbers<[1], [0], [0], [1], [0, 0, 1, 1], [], []>} : vector<8x32xf32>, vector<32x32xf32>, vector<8x32xf32> -> vector<8x32xf32>
    %36 = arith.addf %34, %35 : vector<8x32xf32>
    %37 = math.tanh %36 : vector<8x32xf32>
    %38 = vector.extract_strided_slice %7 {offsets = [56, 0], sizes = [8, 32], strides = [1, 1]} : vector<64x32xf32> to vector<8x32xf32>
    %cst_14 = arith.constant dense<0.000000e+00> : vector<8x32xf32>
    %39 = tpu.matmul %37, %8, %cst_14 {dimension_numbers = #tpu.dot_dimension_numbers<[1], [0], [0], [1], [0, 0, 1, 1], [], []>} : vector<8x32xf32>, vector<32x32xf32>, vector<8x32xf32> -> vector<8x32xf32>
    %40 = arith.addf %38, %39 : vector<8x32xf32>
    %41 = math.tanh %40 : vector<8x32xf32>
    %c0_15 = arith.constant 0 : index
    %c0_16 = arith.constant 0 : index
    %42 = vector.load %arg7[%c0_15, %c0_16] : memref<8x32xf32, #tpu.memory_space<vmem>>, vector<8x32xf32>
    tpu.vector_store %arg7[%c0_15, %c0_16], %41 {strides = array<i32>} : memref<8x32xf32, #tpu.memory_space<vmem>>, vector<8x32xf32>,
    %c0_17 = arith.constant 0 : index
    %c0_18 = arith.constant 0 : index
    %43 = vector.load %arg4[%c0_17, %c0_18] : memref<32x128xf32, #tpu.memory_space<vmem>>, vector<32x128xf32>
    %cst_19 = arith.constant dense<0.000000e+00> : vector<8x128xf32>
    %44 = tpu.matmul %41, %43, %cst_19 {dimension_numbers = #tpu.dot_dimension_numbers<[1], [0], [0], [1], [0, 0, 1, 1], [], []>} : vector<8x32xf32>, vector<32x128xf32>, vector<8x128xf32> -> vector<8x128xf32>
    %c0_20 = arith.constant 0 : index
    %c0_21 = arith.constant 0 : index
    %45 = vector.load %arg5[%c0_20, %c0_21] : memref<1x128xf32, #tpu.memory_space<vmem>>, vector<1x128xf32>
    %46 = vector.broadcast %45 : vector<1x128xf32> to vector<8x128xf32>
    %47 = arith.addf %44, %46 : vector<8x128xf32>
    %cst_22 = arith.constant dense<0xFF800000> : vector<8xf32>
    %48 = vector.multi_reduction <maximumf>, %47, %cst_22 [1] : vector<8x128xf32> to vector<8xf32>
    %49 = vector.shape_cast %48 : vector<8xf32> to vector<8x1xf32>
    %50 = vector.broadcast %49 : vector<8x1xf32> to vector<8x128xf32>
    %51 = arith.subf %47, %50 : vector<8x128xf32>
    %52 = math.exp %51 : vector<8x128xf32>
    %cst_23 = arith.constant dense<0.000000e+00> : vector<8xf32>
    %53 = vector.multi_reduction <add>, %52, %cst_23 [1] : vector<8x128xf32> to vector<8xf32>
    %54 = vector.shape_cast %53 : vector<8xf32> to vector<8x1xf32>
    %55 = math.log %54 : vector<8x1xf32>
    %56 = vector.broadcast %55 : vector<8x1xf32> to vector<8x128xf32>
    %57 = arith.subf %51, %56 : vector<8x128xf32>
    %c0_24 = arith.constant 0 : index
    %c0_25 = arith.constant 0 : index
    %58 = vector.load %arg6[%c0_24, %c0_25] : memref<8x128xf32, #tpu.memory_space<vmem>>, vector<8x128xf32>
    tpu.vector_store %arg6[%c0_24, %c0_25], %57 {strides = array<i32>} : memref<8x128xf32, #tpu.memory_space<vmem>>, vector<8x128xf32>,
    return
  }
}

</mosaic_0001>

<llo_original>
// kernel: tpu_custom_call.1
$region0: #{tpu_custom_call.1}
  #allocation0 [shape = 'u32[]', space=smem, size = 0x4, offset = 0x4, fixed_abs, tag = 'smem constant byte address 0x4 - core index']
  #allocation1 [shape = 'u32[72,128]{1,0:T(1,128)}', space=vmem, size = 0x9000, scoped, tag = 'internal scratch']
  %s0 = inlined_call_operand.vmem [shape: s32[64,1], index: 0, kind: input, shape index: {}]
  %s1 = inlined_call_operand.vmem [shape: f32[128,32], index: 1, kind: input, shape index: {}]
  %s2 = inlined_call_operand.hbm [shape: f32[8,32], index: 2, kind: input, shape index: {}, may-alias: {2,7}]
  %s3 = inlined_call_operand.vmem [shape: f32[32,32], index: 3, kind: input, shape index: {}]
  %s4 = inlined_call_operand.vmem [shape: f32[32,128], index: 4, kind: input, shape index: {}]
  %s5 = inlined_call_operand.vmem [shape: f32[1,128], index: 5, kind: input, shape index: {}]
  %s6 = inlined_call_operand.hbm [shape: f32[8,128], index: 6, kind: output, shape index: {0}]
  %s7 = inlined_call_operand.hbm [shape: f32[8,32], index: 7, kind: output, shape index: {1}, may-alias: {2,7}]
  %8 = xla_tuple %s6, %s7
  %s9 = sld [smem:[#allocation0]]
  $region46: #{tpu_custom_call.1} parent=0
    _
  %s11 = ssub.s32 1, %s9
  %s12 = scalar_select 0, %s11, %s9
  $region1: #{tpu_custom_call.1} parent=0
    #allocation2 [shape = 'u8[4096]{0}', space=vmem, size = 0x1000, scoped, tag = 'input window, operand 2, single buffered']
    #allocation3 [shape = 's32[1]{0}', space=sflag, size = 0x4, scoped, tag = 'scoped memory for tpu_custom_call.1']
    #allocation4 [shape = 's32[1]{0}', space=sflag, size = 0x4, scoped, tag = 'scoped memory for tpu_custom_call.1']
    #allocation5 [shape = 'u8[4096]{0}', space=vmem, size = 0x1000, scoped, tag = 'output window, operand 0, single buffered']
    #allocation6 [shape = 'u8[4096]{0}', space=vmem, size = 0x1000, scoped, tag = 'output window, operand 1, single buffered']
    #allocation7 [shape = 's32[1]{0}', space=sflag, size = 0x4, scoped, tag = 'scoped memory for tpu_custom_call.1']
    %13 = vsyncpa [#allocation3], 0
    %14 = vsyncpa [#allocation4], 0
    %15 = vsyncpa [#allocation7], 0
    // Predicated region
    $region2: #{tpu_custom_call.1} parent=1 // pred_check
      _
    $region3: #{tpu_custom_call.1} parent=1 // pred_check_branch
      %17 = sbr.rel (0) target = $region5
    $region4: #{tpu_custom_call.1} parent=1 // pred_region
      _
    $region5: #{tpu_custom_call.1} parent=1 // pred_fallthru
      _
    // Predicated region
    $region6: #{tpu_custom_call.1} parent=1 // pred_check
      _
    $region7: #{tpu_custom_call.1} parent=1 // pred_check_branch
      %19 = sbr.rel (0) target = $region9
    $region8: #{tpu_custom_call.1} parent=1 // pred_region
      _
    $region9: #{tpu_custom_call.1} parent=1 // pred_fallthru
      _
    // Predicated region
    $region10: #{tpu_custom_call.1} parent=1 // pred_check
      _
    $region11: #{tpu_custom_call.1} parent=1 // pred_check_branch
      %21 = sbr.rel (0) target = $region13
    $region12: #{tpu_custom_call.1} parent=1 // pred_region
      %23 = vsyncadd [#allocation3], 0
      %s25 = sshll.u32 %s2, 4
      %s26 = int_to_ptr.hbm [resolvable:$true] %s25
      %s27 = sshll.u32 [#allocation2], 4
      %s28 = int_to_ptr.vmem [resolvable:$true] %s27
      %30 = dma.hbm_to_vmem [thread:$0]  %s26, 128, %s28, [#allocation3]
    $region13: #{tpu_custom_call.1} parent=1 // pred_fallthru
      _
    // Predicated region
    $region14: #{tpu_custom_call.1} parent=1 // pred_check
      _
    $region15: #{tpu_custom_call.1} parent=1 // pred_check_branch
      %32 = sbr.rel (0) target = $region17
    $region16: #{tpu_custom_call.1} parent=1 // pred_region
      _
    $region17: #{tpu_custom_call.1} parent=1 // pred_fallthru
      _
    // Predicated region
    $region18: #{tpu_custom_call.1} parent=1 // pred_check
      _
    $region19: #{tpu_custom_call.1} parent=1 // pred_check_branch
      %34 = sbr.rel (0) target = $region21
    $region20: #{tpu_custom_call.1} parent=1 // pred_region
      _
    $region21: #{tpu_custom_call.1} parent=1 // pred_fallthru
      _
    // Predicated region
    $region22: #{tpu_custom_call.1} parent=1 // pred_check
      _
    $region23: #{tpu_custom_call.1} parent=1 // pred_check_branch
      %36 = sbr.rel (0) target = $region25
    $region24: #{tpu_custom_call.1} parent=1 // pred_region
      _
    $region25: #{tpu_custom_call.1} parent=1 // pred_fallthru
      _
    // Predicated region
    $region26: #{tpu_custom_call.1} parent=1 // pred_check
      _
    $region27: #{tpu_custom_call.1} parent=1 // pred_check_branch
      %38 = sbr.rel (0) target = $region29
    $region28: #{tpu_custom_call.1} parent=1 // pred_region
      %40 = dma.done [#allocation3], 128
    $region29: #{tpu_custom_call.1} parent=1 // pred_fallthru
      _
    %v41 = vlaneseq
    %v42 = vand.u32 %v41, 127
    %v43 = vld [vmem:[%s0] sm:$0xff]
    %v44 = vld [vmem:[%s0 + $0x8] sm:$0xff]
    %v45 = vld [vmem:[%s0 + $0x10] sm:$0xff]
    %v46 = vld [vmem:[%s0 + $0x18] sm:$0xff]
    %v47 = vld [vmem:[%s0 + $0x20] sm:$0xff]
    %v48 = vld [vmem:[%s0 + $0x28] sm:$0xff]
    %v49 = vld [vmem:[%s0 + $0x30] sm:$0xff]
    %v50 = vld [vmem:[%s0 + $0x38] sm:$0xff]
    %51 = vset.pattern.permute.xlu0 0
    %52 = vperm.xlu0 %51, %v43
    %v53 = vpop.permute.xlu0 %52
    %54 = vset.pattern.permute.xlu0 0
    %55 = vperm.xlu0 %54, %v44
    %v56 = vpop.permute.xlu0 %55
    %57 = vset.pattern.permute.xlu0 0
    %58 = vperm.xlu0 %57, %v45
    %v59 = vpop.permute.xlu0 %58
    %60 = vset.pattern.permute.xlu0 0
    %61 = vperm.xlu0 %60, %v46
    %v62 = vpop.permute.xlu0 %61
    %63 = vset.pattern.permute.xlu0 0
    %64 = vperm.xlu0 %63, %v47
    %v65 = vpop.permute.xlu0 %64
    %66 = vset.pattern.permute.xlu0 0
    %67 = vperm.xlu0 %66, %v48
    %v68 = vpop.permute.xlu0 %67
    %69 = vset.pattern.permute.xlu0 0
    %70 = vperm.xlu0 %69, %v49
    %v71 = vpop.permute.xlu0 %70
    %72 = vset.pattern.permute.xlu0 0
    %73 = vperm.xlu0 %72, %v50
    %v74 = vpop.permute.xlu0 %73
    %vm75 = vcmp.eq.s32.totalorder %v42, %v53
    %vm76 = vcmp.eq.s32.totalorder %v42, %v56
    %vm77 = vcmp.eq.s32.totalorder %v42, %v59
    %vm78 = vcmp.eq.s32.totalorder %v42, %v62
    %vm79 = vcmp.eq.s32.totalorder %v42, %v65
    %vm80 = vcmp.eq.s32.totalorder %v42, %v68
    %vm81 = vcmp.eq.s32.totalorder %v42, %v71
    %vm82 = vcmp.eq.s32.totalorder %v42, %v74
    %v83 = vsel %vm75, 1, 0
    %v84 = vsel %vm76, 1, 0
    %v85 = vsel %vm77, 1, 0
    %v86 = vsel %vm78, 1, 0
    %v87 = vsel %vm79, 1, 0
    %v88 = vsel %vm80, 1, 0
    %v89 = vsel %vm81, 1, 0
    %v90 = vsel %vm82, 1, 0
    %v91 = vcvt.s32.f32 %v83
    %v92 = vcvt.s32.f32 %v84
    %v93 = vcvt.s32.f32 %v85
    %v94 = vcvt.s32.f32 %v86
    %v95 = vcvt.s32.f32 %v87
    %v96 = vcvt.s32.f32 %v88
    %v97 = vcvt.s32.f32 %v89
    %v98 = vcvt.s32.f32 %v90
    %v99 = vld [vmem:[%s1] sm:$0xff]
    %v100 = vld [vmem:[%s1 + $0x8] sm:$0xff]
    %v101 = vld [vmem:[%s1 + $0x10] sm:$0xff]
    %v102 = vld [vmem:[%s1 + $0x18] sm:$0xff]
    %v103 = vld [vmem:[%s1 + $0x20] sm:$0xff]
    %v104 = vld [vmem:[%s1 + $0x28] sm:$0xff]
    %v105 = vld [vmem:[%s1 + $0x30] sm:$0xff]
    %v106 = vld [vmem:[%s1 + $0x38] sm:$0xff]
    %v107 = vld [vmem:[%s1 + $0x40] sm:$0xff]
    %v108 = vld [vmem:[%s1 + $0x48] sm:$0xff]
    %v109 = vld [vmem:[%s1 + $0x50] sm:$0xff]
    %v110 = vld [vmem:[%s1 + $0x58] sm:$0xff]
    %v111 = vld [vmem:[%s1 + $0x60] sm:$0xff]
    %v112 = vld [vmem:[%s1 + $0x68] sm:$0xff]
    %v113 = vld [vmem:[%s1 + $0x70] sm:$0xff]
    %v114 = vld [vmem:[%s1 + $0x78] sm:$0xff]
    %115 = vmatpush.msra.mxu0 %v114
    %116 = vmatpush.msra.mxu0 %v113
    %117 = vmatpush.msra.mxu0 %v112
    %118 = vmatpush.msra.mxu0 %v111
    %119 = vmatpush.msra.mxu0 %v110
    %120 = vmatpush.msra.mxu0 %v109
    %121 = vmatpush.msra.mxu0 %v108
    %122 = vmatpush.msra.mxu0 %v107
    %123 = vmatpush.msra.mxu0 %v106
    %124 = vmatpush.msra.mxu0 %v105
    %125 = vmatpush.msra.mxu0 %v104
    %126 = vmatpush.msra.mxu0 %v103
    %127 = vmatpush.msra.mxu0 %v102
    %128 = vmatpush.msra.mxu0 %v101
    %129 = vmatpush.msra.mxu0 %v100
    %130 = vmatpush.msra.mxu0 %v99
    %131 = vmatmul.f32.gmra.mxu0 %v91
    %v132 = vpop.f32.mrf.mxu0
    %v133 = vadd.f32 0.0, %v132
    %134 = vmatmul.f32.gmra.mxu0 %v92
    %v135 = vpop.f32.mrf.mxu0
    %v136 = vadd.f32 0.0, %v135
    %137 = vmatmul.f32.gmra.mxu0 %v93
    %v138 = vpop.f32.mrf.mxu0
    %v139 = vadd.f32 0.0, %v138
    %140 = vmatmul.f32.gmra.mxu0 %v94
    %v141 = vpop.f32.mrf.mxu0
    %v142 = vadd.f32 0.0, %v141
    %143 = vmatmul.f32.gmra.mxu0 %v95
    %v144 = vpop.f32.mrf.mxu0
    %v145 = vadd.f32 0.0, %v144
    %146 = vmatmul.f32.gmra.mxu0 %v96
    %v147 = vpop.f32.mrf.mxu0
    %v148 = vadd.f32 0.0, %v147
    %149 = vmatmul.f32.gmra.mxu0 %v97
    %v150 = vpop.f32.mrf.mxu0
    %v151 = vadd.f32 0.0, %v150
    %152 = vmatmul.f32.gmra.mxu0 %v98
    %v153 = vpop.f32.mrf.mxu0
    %v154 = vadd.f32 0.0, %v153
    %155 = vdwg.mxu0
    %v156 = vld [vmem:[%s3] sm:$0xff]
    %v157 = vld [vmem:[%s3 + $0x8] sm:$0xff]
    %v158 = vld [vmem:[%s3 + $0x10] sm:$0xff]
    %v159 = vld [vmem:[%s3 + $0x18] sm:$0xff]
    %v160 = vld [vmem:[#allocation2] sm:$0xff]
    %vm161 = vcmask 261120
    %v163 = vsel %vm161, %v160, 0
    %165 = vmatpush.msra.mxu0 0.0
    %166 = vmatpush.msra.mxu0 0.0
    %167 = vmatpush.msra.mxu0 0.0
    %168 = vmatpush.msra.mxu0 0.0
    %169 = vmatpush.msra.mxu0 0.0
    %170 = vmatpush.msra.mxu0 0.0
    %171 = vmatpush.msra.mxu0 0.0
    %172 = vmatpush.msra.mxu0 0.0
    %173 = vmatpush.msra.mxu0 0.0
    %174 = vmatpush.msra.mxu0 0.0
    %175 = vmatpush.msra.mxu0 0.0
    %176 = vmatpush.msra.mxu0 0.0
    %177 = vmatpush.msra.mxu0 %v159
    %178 = vmatpush.msra.mxu0 %v158
    %179 = vmatpush.msra.mxu0 %v157
    %180 = vmatpush.msra.mxu0 %v156
    %181 = vmatmul.f32.gmra.mxu0 %v163
    %v182 = vpop.f32.mrf.mxu0
    %v183 = vadd.f32 0.0, %v182
    %184 = vdwg.mxu0
    %v185 = vadd.f32 %v133, %v183
    %v186 = vtanh.pop %v185
    %v188 = vsel %vm161, %v186, 0
    %190 = vmatpush.msra.mxu0 0.0
    %191 = vmatpush.msra.mxu0 0.0
    %192 = vmatpush.msra.mxu0 0.0
    %193 = vmatpush.msra.mxu0 0.0
    %194 = vmatpush.msra.mxu0 0.0
    %195 = vmatpush.msra.mxu0 0.0
    %196 = vmatpush.msra.mxu0 0.0
    %197 = vmatpush.msra.mxu0 0.0
    %198 = vmatpush.msra.mxu0 0.0
    %199 = vmatpush.msra.mxu0 0.0
    %200 = vmatpush.msra.mxu0 0.0
    %201 = vmatpush.msra.mxu0 0.0
    %202 = vmatpush.msra.mxu0 %v159
    %203 = vmatpush.msra.mxu0 %v158
    %204 = vmatpush.msra.mxu0 %v157
    %205 = vmatpush.msra.mxu0 %v156
    %206 = vmatmul.f32.gmra.mxu0 %v188
    %v207 = vpop.f32.mrf.mxu0
    %v208 = vadd.f32 0.0, %v207
    %209 = vdwg.mxu0
    %v210 = vadd.f32 %v136, %v208
    %v211 = vtanh.pop %v210
    %v213 = vsel %vm161, %v211, 0
    %215 = vmatpush.msra.mxu0 0.0
    %216 = vmatpush.msra.mxu0 0.0
    %217 = vmatpush.msra.mxu0 0.0
    %218 = vmatpush.msra.mxu0 0.0
    %219 = vmatpush.msra.mxu0 0.0
    %220 = vmatpush.msra.mxu0 0.0
    %221 = vmatpush.msra.mxu0 0.0
    %222 = vmatpush.msra.mxu0 0.0
    %223 = vmatpush.msra.mxu0 0.0
    %224 = vmatpush.msra.mxu0 0.0
    %225 = vmatpush.msra.mxu0 0.0
    %226 = vmatpush.msra.mxu0 0.0
    %227 = vmatpush.msra.mxu0 %v159
    %228 = vmatpush.msra.mxu0 %v158
    %229 = vmatpush.msra.mxu0 %v157
    %230 = vmatpush.msra.mxu0 %v156
    %231 = vmatmul.f32.gmra.mxu0 %v213
    %v232 = vpop.f32.mrf.mxu0
    %v233 = vadd.f32 0.0, %v232
    %234 = vdwg.mxu0
    %v235 = vadd.f32 %v139, %v233
    %v236 = vtanh.pop %v235
    %v238 = vsel %vm161, %v236, 0
    %240 = vmatpush.msra.mxu0 0.0
    %241 = vmatpush.msra.mxu0 0.0
    %242 = vmatpush.msra.mxu0 0.0
    %243 = vmatpush.msra.mxu0 0.0
    %244 = vmatpush.msra.mxu0 0.0
    %245 = vmatpush.msra.mxu0 0.0
    %246 = vmatpush.msra.mxu0 0.0
    %247 = vmatpush.msra.mxu0 0.0
    %248 = vmatpush.msra.mxu0 0.0
    %249 = vmatpush.msra.mxu0 0.0
    %250 = vmatpush.msra.mxu0 0.0
    %251 = vmatpush.msra.mxu0 0.0
    %252 = vmatpush.msra.mxu0 %v159
    %253 = vmatpush.msra.mxu0 %v158
    %254 = vmatpush.msra.mxu0 %v157
    %255 = vmatpush.msra.mxu0 %v156
    %256 = vmatmul.f32.gmra.mxu0 %v238
    %v257 = vpop.f32.mrf.mxu0
    %v258 = vadd.f32 0.0, %v257
    %259 = vdwg.mxu0
    %v260 = vadd.f32 %v142, %v258
    %v261 = vtanh.pop %v260
    %v263 = vsel %vm161, %v261, 0
    %265 = vmatpush.msra.mxu0 0.0
    %266 = vmatpush.msra.mxu0 0.0
    %267 = vmatpush.msra.mxu0 0.0
    %268 = vmatpush.msra.mxu0 0.0
    %269 = vmatpush.msra.mxu0 0.0
    %270 = vmatpush.msra.mxu0 0.0
    %271 = vmatpush.msra.mxu0 0.0
    %272 = vmatpush.msra.mxu0 0.0
    %273 = vmatpush.msra.mxu0 0.0
    %274 = vmatpush.msra.mxu0 0.0
    %275 = vmatpush.msra.mxu0 0.0
    %276 = vmatpush.msra.mxu0 0.0
    %277 = vmatpush.msra.mxu0 %v159
    %278 = vmatpush.msra.mxu0 %v158
    %279 = vmatpush.msra.mxu0 %v157
    %280 = vmatpush.msra.mxu0 %v156
    %281 = vmatmul.f32.gmra.mxu0 %v263
    %v282 = vpop.f32.mrf.mxu0
    %v283 = vadd.f32 0.0, %v282
    %284 = vdwg.mxu0
    %v285 = vadd.f32 %v145, %v283
    %v286 = vtanh.pop %v285
    %v288 = vsel %vm161, %v286, 0
    %290 = vmatpush.msra.mxu0 0.0
    %291 = vmatpush.msra.mxu0 0.0
    %292 = vmatpush.msra.mxu0 0.0
    %293 = vmatpush.msra.mxu0 0.0
    %294 = vmatpush.msra.mxu0 0.0
    %295 = vmatpush.msra.mxu0 0.0
    %296 = vmatpush.msra.mxu0 0.0
    %297 = vmatpush.msra.mxu0 0.0
    %298 = vmatpush.msra.mxu0 0.0
    %299 = vmatpush.msra.mxu0 0.0
    %300 = vmatpush.msra.mxu0 0.0
    %301 = vmatpush.msra.mxu0 0.0
    %302 = vmatpush.msra.mxu0 %v159
    %303 = vmatpush.msra.mxu0 %v158
    %304 = vmatpush.msra.mxu0 %v157
    %305 = vmatpush.msra.mxu0 %v156
    %306 = vmatmul.f32.gmra.mxu0 %v288
    %v307 = vpop.f32.mrf.mxu0
    %v308 = vadd.f32 0.0, %v307
    %309 = vdwg.mxu0
    %v310 = vadd.f32 %v148, %v308
    %v311 = vtanh.pop %v310
    %v313 = vsel %vm161, %v311, 0
    %315 = vmatpush.msra.mxu0 0.0
    %316 = vmatpush.msra.mxu0 0.0
    %317 = vmatpush.msra.mxu0 0.0
    %318 = vmatpush.msra.mxu0 0.0
    %319 = vmatpush.msra.mxu0 0.0
    %320 = vmatpush.msra.mxu0 0.0
    %321 = vmatpush.msra.mxu0 0.0
    %322 = vmatpush.msra.mxu0 0.0
    %323 = vmatpush.msra.mxu0 0.0
    %324 = vmatpush.msra.mxu0 0.0
    %325 = vmatpush.msra.mxu0 0.0
    %326 = vmatpush.msra.mxu0 0.0
    %327 = vmatpush.msra.mxu0 %v159
    %328 = vmatpush.msra.mxu0 %v158
    %329 = vmatpush.msra.mxu0 %v157
    %330 = vmatpush.msra.mxu0 %v156
    %331 = vmatmul.f32.gmra.mxu0 %v313
    %v332 = vpop.f32.mrf.mxu0
    %v333 = vadd.f32 0.0, %v332
    %334 = vdwg.mxu0
    %v335 = vadd.f32 %v151, %v333
    %v336 = vtanh.pop %v335
    %v338 = vsel %vm161, %v336, 0
    %340 = vmatpush.msra.mxu0 0.0
    %341 = vmatpush.msra.mxu0 0.0
    %342 = vmatpush.msra.mxu0 0.0
    %343 = vmatpush.msra.mxu0 0.0
    %344 = vmatpush.msra.mxu0 0.0
    %345 = vmatpush.msra.mxu0 0.0
    %346 = vmatpush.msra.mxu0 0.0
    %347 = vmatpush.msra.mxu0 0.0
    %348 = vmatpush.msra.mxu0 0.0
    %349 = vmatpush.msra.mxu0 0.0
    %350 = vmatpush.msra.mxu0 0.0
    %351 = vmatpush.msra.mxu0 0.0
    %352 = vmatpush.msra.mxu0 %v159
    %353 = vmatpush.msra.mxu0 %v158
    %354 = vmatpush.msra.mxu0 %v157
    %355 = vmatpush.msra.mxu0 %v156
    %356 = vmatmul.f32.gmra.mxu0 %v338
    %v357 = vpop.f32.mrf.mxu0
    %v358 = vadd.f32 0.0, %v357
    %359 = vdwg.mxu0
    %v360 = vadd.f32 %v154, %v358
    %v361 = vtanh.pop %v360
    %362 = vst.msk [vmem:[#allocation6] sm:$0xff] %vm161, %v361
    %v363 = vld [vmem:[%s4] sm:$0xff]
    %v364 = vld [vmem:[%s4 + $0x8] sm:$0xff]
    %v365 = vld [vmem:[%s4 + $0x10] sm:$0xff]
    %v366 = vld [vmem:[%s4 + $0x18] sm:$0xff]
    %v367 = vld [vmem:[%s5] sm:$0x1]
    %v369 = vperm.slane %v367, 0
    %v372 = vsel %vm161, %v361, 0
    %374 = vmatpush.msra.mxu0 0.0
    %375 = vmatpush.msra.mxu0 0.0
    %376 = vmatpush.msra.mxu0 0.0
    %377 = vmatpush.msra.mxu0 0.0
    %378 = vmatpush.msra.mxu0 0.0
    %379 = vmatpush.msra.mxu0 0.0
    %380 = vmatpush.msra.mxu0 0.0
    %381 = vmatpush.msra.mxu0 0.0
    %382 = vmatpush.msra.mxu0 0.0
    %383 = vmatpush.msra.mxu0 0.0
    %384 = vmatpush.msra.mxu0 0.0
    %385 = vmatpush.msra.mxu0 0.0
    %386 = vmatpush.msra.mxu0 %v366
    %387 = vmatpush.msra.mxu0 %v365
    %388 = vmatpush.msra.mxu0 %v364
    %389 = vmatpush.msra.mxu0 %v363
    %390 = vmatmul.f32.gmra.mxu0 %v372
    %v391 = vpop.f32.mrf.mxu0
    %v392 = vadd.f32 %v369, %v391
    %393 = vdwg.mxu0
    %394 = vmax.xlane.f32.xlu0 %v392
    %v395 = vpop.xlane.xlu0 %394
    %v396 = vsub.f32 %v392, %v395
    %v397 = vmul.f32 %v396, 1.442695
    %v398 = vpow.pop %v397
    %399 = vadd.xlane.f32.xlu0 %v398
    %v400 = vpop.xlane.xlu0 %399
    %v401 = vlog2.pop %v400
    %v402 = vmul.f32 %v401, 0.6931472
    %v403 = vsub.f32 %v396, %v402
    %404 = vst [vmem:[#allocation5] sm:$0xff] %v403
    // Predicated region
    $region30: #{tpu_custom_call.1} parent=1 // pred_check
      _
    $region31: #{tpu_custom_call.1} parent=1 // pred_check_branch
      %406 = sbr.rel (0) target = $region33
    $region32: #{tpu_custom_call.1} parent=1 // pred_region
      %408 = vsyncadd [#allocation4], 0
      %s410 = sshll.u32 [#allocation5], 4
      %s411 = int_to_ptr.vmem [resolvable:$true] %s410
      %s412 = sshll.u32 %s6, 4
      %s413 = int_to_ptr.hbm [resolvable:$true] %s412
      %415 = dma.vmem_to_hbm [thread:$0]  %s411, 128, %s413, [#allocation4]
    $region33: #{tpu_custom_call.1} parent=1 // pred_fallthru
      _
    // Predicated region
    $region34: #{tpu_custom_call.1} parent=1 // pred_check
      _
    $region35: #{tpu_custom_call.1} parent=1 // pred_check_branch
      %417 = sbr.rel (0) target = $region37
    $region36: #{tpu_custom_call.1} parent=1 // pred_region
      %419 = vsyncadd [#allocation7], 0
      %s421 = sshll.u32 [#allocation6], 4
      %s422 = int_to_ptr.vmem [resolvable:$true] %s421
      %s423 = sshll.u32 %s7, 4
      %s424 = int_to_ptr.hbm [resolvable:$true] %s423
      %426 = dma.vmem_to_hbm [thread:$0]  %s422, 128, %s424, [#allocation7]
    $region37: #{tpu_custom_call.1} parent=1 // pred_fallthru
      _
    // Predicated region
    $region38: #{tpu_custom_call.1} parent=1 // pred_check
      _
    $region39: #{tpu_custom_call.1} parent=1 // pred_check_branch
      %428 = sbr.rel (0) target = $region41
    $region40: #{tpu_custom_call.1} parent=1 // pred_region
      %430 = dma.done [#allocation4], 128
    $region41: #{tpu_custom_call.1} parent=1 // pred_fallthru
      _
    // Predicated region
    $region42: #{tpu_custom_call.1} parent=1 // pred_check
      _
    $region43: #{tpu_custom_call.1} parent=1 // pred_check_branch
      %432 = sbr.rel (0) target = $region45
    $region44: #{tpu_custom_call.1} parent=1 // pred_region
      %434 = dma.done [#allocation7], 128
    $region45: #{tpu_custom_call.1} parent=1 // pred_fallthru
      _
    %435 = vsyncpa [#allocation3], 1
    %436 = vsyncpa [#allocation4], 1
    %437 = vsyncpa [#allocation7], 1

</llo_original>
